<compile_context>
chip_gen: v7x
topology: tpu7x:2x2x1
jax: 0.10.0
libtpu: 0.0.40
codegen_flags: <defaults>
</compile_context>

<pallas_src>
import jax
import jax.numpy as jnp
from jax.experimental import pallas as pl
from jax.experimental.pallas import tpu as pltpu


# --------------------------------------------------------------------------
# Kernel bodies
# --------------------------------------------------------------------------
def _fmod_tensor_kernel(a_ref, b_ref, o_ref):
    """out = fmod(fmod(a, b), 1.0) with an elementwise divisor tile."""
    a = a_ref[...].astype(jnp.float32)    # upcast (no-op for f32 inputs)
    b = b_ref[...].astype(jnp.float32)
    c = a - jnp.trunc(a / b) * b          # fmod(a, b)
    o_ref[...] = (c - jnp.trunc(c)).astype(o_ref.dtype)   # fmod(c, 1.0)


def _fmod_scalar_kernel(b_ref, a_ref, o_ref):
    """out = fmod(fmod(a, b_scalar), 1.0); b is an f32 (1,1) SMEM scalar."""
    a = a_ref[...].astype(jnp.float32)
    b = b_ref[0, 0]                       # f32 scalar read from SMEM
    c = a - jnp.trunc(a / b) * b          # fmod(a, b)
    o_ref[...] = (c - jnp.trunc(c)).astype(o_ref.dtype)   # fmod(c, 1.0)


# --------------------------------------------------------------------------
# Wrapper
# --------------------------------------------------------------------------
_LANES = 128


def _vmem_budget_bytes():
    """(double-buffered footprint budget, vmem_limit_bytes) per generation."""
    try:
        phys = pltpu.get_tpu_info().vmem_capacity_bytes
    except Exception:
        phys = 64 * 1024 * 1024           # conservative (v7x-sized) fallback
    if phys >= 128 * 1024 * 1024:         # v5e / v6e: 128 MiB physical
        return 48 * 1024 * 1024, 64 * 1024 * 1024
    # v7x: 64 MiB physical / 32 MiB default scoped — stay well under half.
    return 24 * 1024 * 1024, 32 * 1024 * 1024


def simple_fmod(a: jax.Array, b: jax.Array, *,
                force_pallas: bool = False,
                min_pallas_elems: int = 1 << 20) -> jax.Array:
    """Replicates SimpleFmodModule.forward(a, b).

    `b` may be a scalar (shape ()) -- mirrors the `b.size() == torch.Size([])`
    branch -- or any shape broadcastable to `a`.
    """
    a = jnp.asarray(a)
    dtype = a.dtype
    b = jnp.asarray(b)

    orig_shape = a.shape
    n = a.size
    scalar_b = (b.ndim == 0) or (b.size == 1)

    # ---- small-size fallback: launch overhead dominates below ~1M elems ----
    if not force_pallas and n < min_pallas_elems:
        c = jnp.fmod(a, b.astype(dtype))
        return jnp.fmod(c, jnp.asarray(1.0, dtype=dtype))

    itemsize = jnp.dtype(dtype).itemsize
    sublane = {4: 8, 2: 16, 1: 32}.get(itemsize, 8)   # dtype-aware packing

    # Lane-dense slab. The reshape from a contiguous NCHW tensor is free; only
    # a ragged tail (n % 128 != 0) needs a pad pass.
    # TODO(synk): for ragged n, replace the wrapper-side pad + out[:n] slice
    # with an in-kernel masked store of the last block (saves 2 HBM passes).
    a_flat = a.reshape(-1)
    pad = (-n) % _LANES
    if pad:
        a_flat = jnp.pad(a_flat, (0, pad))
    rows = a_flat.size // _LANES
    a2 = a_flat.reshape(rows, _LANES)

    # ---- block sizing: biggest block that fits the per-generation budget ----
    n_streamed = 2 if scalar_b else 3     # scalar branch: a in + out only
    budget, vmem_limit = _vmem_budget_bytes()
    # double-buffered footprint = n_streamed * 2 * br * 128 * itemsize
    br_max = budget // (n_streamed * 2 * _LANES * itemsize)
    br_max = max(sublane, (br_max // sublane) * sublane)
    if rows <= br_max:
        br = rows                         # single / full block (always legal)
    else:
        br = br_max                       # multiple of sublane; partial tail OK
    num_blocks = pl.cdiv(rows, br)

    tile_spec = pl.BlockSpec((br, _LANES), lambda i: (i, 0))
    out_shape = jax.ShapeDtypeStruct((rows, _LANES), dtype)
    cparams = pltpu.CompilerParams(
        # TODO(synk): confirm on a v7x dump that "parallel" shards row-blocks
        # across both TensorCores; switch to pltpu.CORE_PARALLEL if not.
        dimension_semantics=("parallel",),
        vmem_limit_bytes=vmem_limit,
    )
    cost = pl.CostEstimate(flops=6 * n, transcendentals=0,
                           bytes_accessed=n_streamed * n * itemsize)

    if scalar_b:
        # Scalar divisor lives in SMEM as f32 (SMEM is a 32-bit scalar space);
        # no HBM-sized broadcast / extra DMA stream.
        b_smem = jnp.asarray(b, jnp.float32).reshape(1, 1)
        out2 = pl.pallas_call(
            _fmod_scalar_kernel,
            out_shape=out_shape,
            grid=(num_blocks,),
            in_specs=[
                pl.BlockSpec(memory_space=pltpu.MemorySpace.SMEM),
                tile_spec,
            ],
            out_specs=tile_spec,
            compiler_params=cparams,
            cost_estimate=cost,
        )(b_smem, a2)
    else:
        # TODO(synk): when b is broadcastable but smaller than a, keep it
        # VMEM-resident (constant-index BlockSpec) instead of materializing
        # the full-size broadcast in HBM.
        b_full = jnp.broadcast_to(b.astype(dtype), orig_shape).reshape(-1)
        if pad:
            # Pad divisor with ones so the (discarded) tail never divides by 0.
            b_full = jnp.pad(b_full, (0, pad), constant_values=1)
        b2 = b_full.reshape(rows, _LANES)
        out2 = pl.pallas_call(
            _fmod_tensor_kernel,
            out_shape=out_shape,
            grid=(num_blocks,),
            in_specs=[tile_spec, tile_spec],
            out_specs=tile_spec,
            compiler_params=cparams,
            cost_estimate=cost,
        )(a2, b2)

    out = out2.reshape(-1)
    if pad:
        out = out[:n]
    return out.reshape(orig_shape)


# --------------------------------------------------------------------------
# Self-test
# --------------------------------------------------------------------------
if __name__ == "__main__":
    key = jax.random.PRNGKey(0)
    ka, kb = jax.random.split(key)

    # Small NCHW-style input consistent with the test module.
    a = jax.random.normal(ka, (2, 4, 16, 16), dtype=jnp.float32) * 5.0
    # Tensor-divisor branch: non-zero, mixed magnitude, same shape as `a`.
    b = jax.random.uniform(kb, (2, 4, 16, 16), dtype=jnp.float32,
                           minval=0.5, maxval=3.0)

    # Reference in plain JAX (jnp.fmod is C-style fmod, same as torch.fmod).
    # TODO(synk): trunc(a/b)*b is not bit-exact std::fmod for adversarial |a|>>|b|.
    ref = jnp.fmod(jnp.fmod(a, b), jnp.float32(1.0))

    # Tensor-divisor branch, forced through the Pallas kernel.
    out = simple_fmod(a, b, force_pallas=True)
    jax.block_until_ready(out)
    assert jnp.allclose(out, ref, atol=1e-5, rtol=1e-5), "tensor-b mismatch"

    # Scalar-divisor branch (b.size() == torch.Size([])) -> SMEM scalar path.
    b_scalar = jnp.float32(2.5)
    out_s = simple_fmod(a, b_scalar, force_pallas=True)
    jax.block_until_ready(out_s)
    ref_s = jnp.fmod(jnp.fmod(a, b_scalar), jnp.float32(1.0))
    assert jnp.allclose(out_s, ref_s, atol=1e-5, rtol=1e-5), "scalar-b mismatch"

    # Default path: at this (tiny) size the wrapper falls back to fused XLA.
    out_fb = simple_fmod(a, b)
    jax.block_until_ready(out_fb)
    assert jnp.allclose(out_fb, ref, atol=1e-5, rtol=1e-5), "fallback mismatch"

    print("KERNEL_OK")
</pallas_src>

<mosaic_0001>
module attributes {stable_mosaic.version = 11 : i64} {
  func.func @_fmod_tensor_kernel(%arg0: i32, %arg1: memref<16x128xf32, #tpu.memory_space<vmem>>, %arg2: memref<16x128xf32, #tpu.memory_space<vmem>>, %arg3: memref<16x128xf32, #tpu.memory_space<vmem>>) attributes {dimension_semantics = [#tpu.dimension_semantics<parallel>], iteration_bounds = array<i64: 1>, scalar_prefetch = 0 : i64, scratch_operands = 0 : i64, tpu.core_type = #tpu.core_type<tc>, window_params = [{transform_indices = @transform_0, window_bounds = array<i64: 16, 128>}, {transform_indices = @transform_1, window_bounds = array<i64: 16, 128>}, {transform_indices = @transform_2, window_bounds = array<i64: 16, 128>}]} {
    %c0 = arith.constant 0 : index
    %c0_0 = arith.constant 0 : index
    %0 = vector.load %arg1[%c0, %c0_0] : memref<16x128xf32, #tpu.memory_space<vmem>>, vector<16x128xf32>
    %c0_1 = arith.constant 0 : index
    %c0_2 = arith.constant 0 : index
    %1 = vector.load %arg2[%c0_1, %c0_2] : memref<16x128xf32, #tpu.memory_space<vmem>>, vector<16x128xf32>
    %2 = arith.divf %0, %1 : vector<16x128xf32>
    %cst = arith.constant 0.000000e+00 : f32
    %3 = vector.broadcast %cst : f32 to vector<16x128xf32>
    %4 = arith.cmpf olt, %2, %3 : vector<16x128xf32>
    %5 = math.ceil %2 : vector<16x128xf32>
    %6 = math.floor %2 : vector<16x128xf32>
    %7 = arith.select %4, %5, %6 : vector<16x128xi1>, vector<16x128xf32>
    %8 = arith.mulf %7, %1 : vector<16x128xf32>
    %9 = arith.subf %0, %8 : vector<16x128xf32>
    %cst_3 = arith.constant 0.000000e+00 : f32
    %10 = vector.broadcast %cst_3 : f32 to vector<16x128xf32>
    %11 = arith.cmpf olt, %9, %10 : vector<16x128xf32>
    %12 = math.ceil %9 : vector<16x128xf32>
    %13 = math.floor %9 : vector<16x128xf32>
    %14 = arith.select %11, %12, %13 : vector<16x128xi1>, vector<16x128xf32>
    %15 = arith.subf %9, %14 : vector<16x128xf32>
    %c0_4 = arith.constant 0 : index
    %c0_5 = arith.constant 0 : index
    %16 = vector.load %arg3[%c0_4, %c0_5] : memref<16x128xf32, #tpu.memory_space<vmem>>, vector<16x128xf32>
    tpu.vector_store %arg3[%c0_4, %c0_5], %15 {strides = array<i32>} : memref<16x128xf32, #tpu.memory_space<vmem>>, vector<16x128xf32>,
    return
  }
  func.func @transform_0(%arg0: i32) -> (i32, i32) {
    %c0_i32 = arith.constant 0 : i32
    %c0_i32_0 = arith.constant 0 : i32
    return %arg0, %c0_i32 : i32, i32
  }
  func.func @transform_1(%arg0: i32) -> (i32, i32) {
    %c0_i32 = arith.constant 0 : i32
    %c0_i32_0 = arith.constant 0 : i32
    return %arg0, %c0_i32 : i32, i32
  }
  func.func @transform_2(%arg0: i32) -> (i32, i32) {
    %c0_i32 = arith.constant 0 : i32
    %c0_i32_0 = arith.constant 0 : i32
    return %arg0, %c0_i32 : i32, i32
  }
}

</mosaic_0001>

<llo_original>
// kernel: tpu_custom_call.1
$region0: #{tpu_custom_call.1}
  #allocation0 [shape = 'u32[]', space=smem, size = 0x4, offset = 0x4, fixed_abs, tag = 'smem constant byte address 0x4 - core index']
  #allocation1 [shape = 'u32[144,128]{1,0:T(1,128)}', space=vmem, size = 0x12000, scoped, tag = 'internal scratch']
  %s0 = inlined_call_operand.hbm [shape: f32[16,128], index: 0, kind: input, shape index: {}]
  %s1 = inlined_call_operand.hbm [shape: f32[16,128], index: 1, kind: input, shape index: {}]
  %s2 = inlined_call_operand.hbm [shape: f32[16,128], index: 2, kind: output, shape index: {}]
  %s3 = sld [smem:[#allocation0]]
  $region26: #{tpu_custom_call.1} parent=0
    _
  %s5 = ssub.s32 1, %s3
  %s6 = scalar_select 0, %s5, %s3
  $region1: #{tpu_custom_call.1} parent=0
    #allocation2 [shape = 'u8[8192]{0}', space=vmem, size = 0x2000, scoped, tag = 'input window, operand 0, single buffered']
    #allocation3 [shape = 's32[1]{0}', space=sflag, size = 0x4, scoped, tag = 'scoped memory for tpu_custom_call.1']
    #allocation4 [shape = 's32[1]{0}', space=sflag, size = 0x4, scoped, tag = 'scoped memory for tpu_custom_call.1']
    #allocation5 [shape = 'u8[8192]{0}', space=vmem, size = 0x2000, scoped, tag = 'input window, operand 1, single buffered']
    #allocation6 [shape = 's32[1]{0}', space=sflag, size = 0x4, scoped, tag = 'scoped memory for tpu_custom_call.1']
    #allocation7 [shape = 'u8[8192]{0}', space=vmem, size = 0x2000, scoped, tag = 'output window, operand 0, single buffered']
    %7 = vsyncpa [#allocation3], 0
    %8 = vsyncpa [#allocation6], 0
    %9 = vsyncpa [#allocation4], 0
    // Predicated region
    $region2: #{tpu_custom_call.1} parent=1 // pred_check
      _
    $region3: #{tpu_custom_call.1} parent=1 // pred_check_branch
      %11 = sbr.rel (0) target = $region5
    $region4: #{tpu_custom_call.1} parent=1 // pred_region
      %s13 = ssub.s32 256, 256
      %14 = vsyncadd [#allocation3], %s13
      %s15 = sshll.u32 [#allocation2], 4
      %s16 = int_to_ptr.vmem [resolvable:$true] %s15
      %21 = dma.hbm_to_vmem [thread:$0]  %s0, 256, %s16, [#allocation3], 128, 128, 8
    $region5: #{tpu_custom_call.1} parent=1 // pred_fallthru
      _
    // Predicated region
    $region6: #{tpu_custom_call.1} parent=1 // pred_check
      _
    $region7: #{tpu_custom_call.1} parent=1 // pred_check_branch
      %23 = sbr.rel (0) target = $region9
    $region8: #{tpu_custom_call.1} parent=1 // pred_region
      %s25 = ssub.s32 256, 256
      %26 = vsyncadd [#allocation6], %s25
      %s27 = sshll.u32 [#allocation5], 4
      %s28 = int_to_ptr.vmem [resolvable:$true] %s27
      %33 = dma.hbm_to_vmem [thread:$0]  %s1, 256, %s28, [#allocation6], 128, 128, 8
    $region9: #{tpu_custom_call.1} parent=1 // pred_fallthru
      _
    // Predicated region
    $region10: #{tpu_custom_call.1} parent=1 // pred_check
      _
    $region11: #{tpu_custom_call.1} parent=1 // pred_check_branch
      %35 = sbr.rel (0) target = $region13
    $region12: #{tpu_custom_call.1} parent=1 // pred_region
      %36 = dma.done [#allocation3], 256
    $region13: #{tpu_custom_call.1} parent=1 // pred_fallthru
      _
    // Predicated region
    $region14: #{tpu_custom_call.1} parent=1 // pred_check
      _
    $region15: #{tpu_custom_call.1} parent=1 // pred_check_branch
      %38 = sbr.rel (0) target = $region17
    $region16: #{tpu_custom_call.1} parent=1 // pred_region
      %39 = dma.done [#allocation6], 256
    $region17: #{tpu_custom_call.1} parent=1 // pred_fallthru
      _
    %v40 = vld [vmem:[#allocation2] sm:$0xff]
    %v41 = vld [vmem:[#allocation2 + $0x8] sm:$0xff]
    %v42 = vld [vmem:[#allocation5] sm:$0xff]
    %v43 = vld [vmem:[#allocation5 + $0x8] sm:$0xff]
    %v44 = vrcp.pop %v42
    %v45 = vmul.f32 %v40, %v44
    %v46 = vrcp.pop %v43
    %v47 = vmul.f32 %v41, %v46
    %vm48 = vcmp.lt.f32.partialorder %v45, 0.0
    %vm49 = vcmp.lt.f32.partialorder %v47, 0.0
    %v50 = vceil.f32 %v45
    %v51 = vceil.f32 %v47
    %v52 = vfloor.f32 %v45
    %v53 = vfloor.f32 %v47
    %v54 = vsel %vm48, %v50, %v52
    %v55 = vsel %vm49, %v51, %v53
    %v56 = vmul.f32 %v54, %v42
    %v57 = vmul.f32 %v55, %v43
    %v58 = vsub.f32 %v40, %v56
    %v59 = vsub.f32 %v41, %v57
    %vm60 = vcmp.lt.f32.partialorder %v58, 0.0
    %vm61 = vcmp.lt.f32.partialorder %v59, 0.0
    %v62 = vceil.f32 %v58
    %v63 = vceil.f32 %v59
    %v64 = vfloor.f32 %v58
    %v65 = vfloor.f32 %v59
    %v66 = vsel %vm60, %v62, %v64
    %v67 = vsel %vm61, %v63, %v65
    %v68 = vsub.f32 %v58, %v66
    %v69 = vsub.f32 %v59, %v67
    %70 = vst [vmem:[#allocation7] sm:$0xff] %v68
    %71 = vst [vmem:[#allocation7 + $0x8] sm:$0xff] %v69
    // Predicated region
    $region18: #{tpu_custom_call.1} parent=1 // pred_check
      _
    $region19: #{tpu_custom_call.1} parent=1 // pred_check_branch
      %73 = sbr.rel (0) target = $region21
    $region20: #{tpu_custom_call.1} parent=1 // pred_region
      %s75 = ssub.s32 256, 256
      %76 = vsyncadd [#allocation4], %s75
      %s77 = sshll.u32 [#allocation7], 4
      %s78 = int_to_ptr.vmem [resolvable:$true] %s77
      %83 = dma.vmem_to_hbm [thread:$0]  %s78, 256, %s2, [#allocation4], 128, 128, 8
    $region21: #{tpu_custom_call.1} parent=1 // pred_fallthru
      _
    // Predicated region
    $region22: #{tpu_custom_call.1} parent=1 // pred_check
      _
    $region23: #{tpu_custom_call.1} parent=1 // pred_check_branch
      %85 = sbr.rel (0) target = $region25
    $region24: #{tpu_custom_call.1} parent=1 // pred_region
      %86 = dma.done [#allocation4], 256
    $region25: #{tpu_custom_call.1} parent=1 // pred_fallthru
      _
    %87 = vsyncpa [#allocation3], 1
    %88 = vsyncpa [#allocation6], 1
    %89 = vsyncpa [#allocation4], 1

</llo_original>
